<compile_context>
chip_gen: v7x
topology: tpu7x:2x2x1
jax: 0.10.0
libtpu: 0.0.40
codegen_flags: <defaults>
</compile_context>

<pallas_src>
import math
import functools

import jax
import jax.numpy as jnp
from jax.experimental import pallas as pl
from jax.experimental.pallas import tpu as pltpu


_VMEM_LIMIT = 48 * 1024 * 1024   # safe on v5e/v6e (128 MiB) and v7x (64 MiB)
_LN_EPS = 1e-5
_NEG_INF = -1e30                 # f32-safe large negative for causal mask


def _tile(dim, target, minimum):
    """Largest power-of-two-ish tile <= target dividing dim, else full dim."""
    t = target
    while t >= minimum:
        if dim % t == 0:
            return t
        t //= 2
    return dim


# ---------------------------- Pallas kernels ----------------------------

def _linear_kernel(x_ref, w_ref, b_ref, o_ref, acc_ref, *, activation, nk):
    @pl.when(pl.program_id(2) == 0)
    def _init():
        acc_ref[...] = jnp.zeros_like(acc_ref)

    acc_ref[...] += jnp.dot(x_ref[...], w_ref[...],
                            preferred_element_type=jnp.float32)

    @pl.when(pl.program_id(2) == nk - 1)
    def _finalize():
        y = acc_ref[...] + b_ref[...]
        if activation == "relu":
            y = jnp.maximum(y, 0.0)
        o_ref[...] = y.astype(o_ref.dtype)


def linear(x2d, w, b, activation=None, out_dtype=jnp.float32,
           tm=256, tn=256, tk=512):
    """y = act(x @ w + b), K-accumulated, bf16 MXU inputs, f32 accumulation."""
    M, K = x2d.shape
    K2, N = w.shape
    assert K == K2
    x2d = x2d.astype(jnp.bfloat16)
    w = w.astype(jnp.bfloat16)
    b = b.astype(jnp.float32).reshape(1, N)
    tm = _tile(M, tm, 8)
    tn = _tile(N, tn, 128)
    tk = _tile(K, tk, 128)
    nk = K // tk
    kern = functools.partial(_linear_kernel, activation=activation, nk=nk)
    return pl.pallas_call(
        kern,
        out_shape=jax.ShapeDtypeStruct((M, N), out_dtype),
        grid=(M // tm, N // tn, nk),
        in_specs=[pl.BlockSpec((tm, tk), lambda i, j, k: (i, k)),
                  pl.BlockSpec((tk, tn), lambda i, j, k: (k, j)),
                  pl.BlockSpec((1, tn), lambda i, j, k: (0, j))],
        out_specs=pl.BlockSpec((tm, tn), lambda i, j, k: (i, j)),
        scratch_shapes=[pltpu.VMEM((tm, tn), jnp.float32)],
        compiler_params=pltpu.CompilerParams(
            dimension_semantics=("parallel", "parallel", "arbitrary"),
            vmem_limit_bytes=_VMEM_LIMIT),
    )(x2d, w, b)


def _linear_add_ln_kernel(x_ref, w_ref, b_ref, r_ref, g_ref, bb_ref,
                          *out_and_scratch, nk, with_softmax):
    if with_softmax:
        o_ref, sm_ref, acc_ref = out_and_scratch
    else:
        o_ref, acc_ref = out_and_scratch
        sm_ref = None

    @pl.when(pl.program_id(1) == 0)
    def _init():
        acc_ref[...] = jnp.zeros_like(acc_ref)

    acc_ref[...] += jnp.dot(x_ref[...], w_ref[...],
                            preferred_element_type=jnp.float32)

    @pl.when(pl.program_id(1) == nk - 1)
    def _finalize():
        y = acc_ref[...] + b_ref[...] + r_ref[...]
        mean = jnp.mean(y, axis=-1, keepdims=True)
        var = jnp.mean((y - mean) ** 2, axis=-1, keepdims=True)
        out = (y - mean) * jax.lax.rsqrt(var + _LN_EPS)
        out = out * g_ref[...] + bb_ref[...]
        o_ref[...] = out.astype(o_ref.dtype)
        if with_softmax:
            m = jnp.max(out, axis=-1, keepdims=True)
            e = jnp.exp(out - m)
            inv = pl.reciprocal(jnp.sum(e, axis=-1, keepdims=True), approx=True)
            sm_ref[...] = (e * inv).astype(sm_ref.dtype)


def linear_add_layernorm(x2d, w, b, res2d, gamma, beta, with_softmax=False,
                         tm=256, tk=512):
    """LN(res + x @ w + b) fused into the matmul epilogue.

    If with_softmax, also returns softmax(LN(...), axis=-1) (used for F_t on
    the final decoder layer) without re-reading the activation from HBM.
    """
    M, K = x2d.shape
    K2, N = w.shape
    assert K == K2 and res2d.shape == (M, N)
    x2d = x2d.astype(jnp.bfloat16)
    w = w.astype(jnp.bfloat16)
    b = b.astype(jnp.float32).reshape(1, N)
    res2d = res2d.astype(jnp.float32)
    gamma = gamma.astype(jnp.float32).reshape(1, N)
    beta = beta.astype(jnp.float32).reshape(1, N)
    tm = _tile(M, tm, 8)
    tk = _tile(K, tk, 128)
    nk = K // tk
    kern = functools.partial(_linear_add_ln_kernel, nk=nk,
                             with_softmax=with_softmax)
    out_shape = [jax.ShapeDtypeStruct((M, N), jnp.float32)]
    out_specs = [pl.BlockSpec((tm, N), lambda i, k: (i, 0))]
    if with_softmax:
        out_shape.append(jax.ShapeDtypeStruct((M, N), jnp.float32))
        out_specs.append(pl.BlockSpec((tm, N), lambda i, k: (i, 0)))
    res = pl.pallas_call(
        kern,
        out_shape=tuple(out_shape),
        grid=(M // tm, nk),
        in_specs=[pl.BlockSpec((tm, tk), lambda i, k: (i, k)),
                  pl.BlockSpec((tk, N), lambda i, k: (k, 0)),
                  pl.BlockSpec((1, N), lambda i, k: (0, 0)),
                  pl.BlockSpec((tm, N), lambda i, k: (i, 0)),
                  pl.BlockSpec((1, N), lambda i, k: (0, 0)),
                  pl.BlockSpec((1, N), lambda i, k: (0, 0))],
        out_specs=tuple(out_specs),
        scratch_shapes=[pltpu.VMEM((tm, N), jnp.float32)],
        compiler_params=pltpu.CompilerParams(
            dimension_semantics=("parallel", "arbitrary"),
            vmem_limit_bytes=_VMEM_LIMIT),
    )(x2d, w, b, res2d, gamma, beta)
    if with_softmax:
        return res[0], res[1]
    return res[0]


def _self_attn_kernel(qkv_ref, o_ref, *, num_heads, scale):
    qkv = qkv_ref[...]                       # (S, 3D) bf16
    S = qkv.shape[0]
    D = qkv.shape[1] // 3
    Dh = D // num_heads
    q = qkv[:, 0:D]
    k = qkv[:, D:2 * D]
    v = qkv[:, 2 * D:3 * D]
    row = jax.lax.broadcasted_iota(jnp.int32, (S, S), 0)
    col = jax.lax.broadcasted_iota(jnp.int32, (S, S), 1)
    causal = col > row
    outs = []
    for h in range(num_heads):               # static unroll over heads
        qh = q[:, h * Dh:(h + 1) * Dh]
        kh = k[:, h * Dh:(h + 1) * Dh]
        vh = v[:, h * Dh:(h + 1) * Dh]
        s = jax.lax.dot_general(qh, kh, (((1,), (1,)), ((), ())),
                                preferred_element_type=jnp.float32) * scale
        s = jnp.where(causal, _NEG_INF, s)
        m = jnp.max(s, axis=-1, keepdims=True)
        p = jnp.exp(s - m)
        inv = pl.reciprocal(jnp.sum(p, axis=-1, keepdims=True), approx=True)
        p = p * inv
        outs.append(jnp.dot(p.astype(vh.dtype), vh,
                            preferred_element_type=jnp.float32))
    # single lane-dense (S, D) store
    o_ref[...] = jnp.concatenate(outs, axis=-1).astype(o_ref.dtype)


def self_attention(qkv, num_heads):
    B, S, D3 = qkv.shape
    D = D3 // 3
    Dh = D // num_heads
    kern = functools.partial(_self_attn_kernel, num_heads=num_heads,
                             scale=1.0 / math.sqrt(Dh))
    return pl.pallas_call(
        kern,
        out_shape=jax.ShapeDtypeStruct((B, S, D), jnp.bfloat16),
        grid=(B,),
        in_specs=[pl.BlockSpec((None, S, D3), lambda b: (b, 0, 0))],
        out_specs=pl.BlockSpec((None, S, D), lambda b: (b, 0, 0)),
        compiler_params=pltpu.CompilerParams(
            dimension_semantics=("parallel",),
            vmem_limit_bytes=_VMEM_LIMIT),
    )(qkv.astype(jnp.bfloat16))


def _cross_attn_kernel(q_ref, kv_ref, o_ref, *, num_heads, scale):
    q = q_ref[...]                           # (S, D)  bf16
    kv = kv_ref[...]                         # (Nv, 2D) bf16
    D = q.shape[1]
    k = kv[:, :D]
    v = kv[:, D:]
    Dh = D // num_heads
    outs = []
    for h in range(num_heads):
        qh = q[:, h * Dh:(h + 1) * Dh]
        kh = k[:, h * Dh:(h + 1) * Dh]
        vh = v[:, h * Dh:(h + 1) * Dh]
        s = jax.lax.dot_general(qh, kh, (((1,), (1,)), ((), ())),
                                preferred_element_type=jnp.float32) * scale
        m = jnp.max(s, axis=-1, keepdims=True)
        p = jnp.exp(s - m)
        inv = pl.reciprocal(jnp.sum(p, axis=-1, keepdims=True), approx=True)
        p = p * inv
        outs.append(jnp.dot(p.astype(vh.dtype), vh,
                            preferred_element_type=jnp.float32))
    o_ref[...] = jnp.concatenate(outs, axis=-1).astype(o_ref.dtype)


def cross_attention(q, kv, num_heads):
    B, S, D = q.shape
    Nv = kv.shape[1]
    Dh = D // num_heads
    kern = functools.partial(_cross_attn_kernel, num_heads=num_heads,
                             scale=1.0 / math.sqrt(Dh))
    return pl.pallas_call(
        kern,
        out_shape=jax.ShapeDtypeStruct((B, S, D), jnp.bfloat16),
        grid=(B,),
        in_specs=[pl.BlockSpec((None, S, D), lambda b: (b, 0, 0)),
                  pl.BlockSpec((None, Nv, 2 * D), lambda b: (b, 0, 0))],
        out_specs=pl.BlockSpec((None, S, D), lambda b: (b, 0, 0)),
        compiler_params=pltpu.CompilerParams(
            dimension_semantics=("parallel",),
            vmem_limit_bytes=_VMEM_LIMIT),
    )(q.astype(jnp.bfloat16), kv.astype(jnp.bfloat16))


# ---------------------------- model glue ----------------------------

def decoder_layer(x, fv, p, num_heads, final_softmax=False):
    """nn.TransformerDecoderLayer (post-norm, relu FFN); dropout omitted."""
    B, S, D = x.shape
    Nv = fv.shape[1]

    # --- self-attention: fused QKV proj; out-proj fused with add+LN1 ---
    qkv = linear(x.reshape(-1, D), p["sa_wqkv"], p["sa_bqkv"],
                 out_dtype=jnp.bfloat16).reshape(B, S, 3 * D)
    sa = self_attention(qkv, num_heads)                         # (B,S,D) bf16
    x1 = linear_add_layernorm(sa.reshape(-1, D), p["sa_wo"], p["sa_bo"],
                              x.reshape(-1, D), p["ln1_g"], p["ln1_b"])
    x1 = x1.reshape(B, S, D)

    # --- cross-attention: fused KV proj; out-proj fused with add+LN2 ---
    q = linear(x1.reshape(-1, D), p["ca_wq"], p["ca_bq"],
               out_dtype=jnp.bfloat16).reshape(B, S, D)
    kv = linear(fv.reshape(-1, D), p["ca_wkv"], p["ca_bkv"],
                out_dtype=jnp.bfloat16).reshape(B, Nv, 2 * D)
    ca = cross_attention(q, kv, num_heads)                      # (B,S,D) bf16
    x2 = linear_add_layernorm(ca.reshape(-1, D), p["ca_wo"], p["ca_bo"],
                              x1.reshape(-1, D), p["ln2_g"], p["ln2_b"])
    x2 = x2.reshape(B, S, D)

    # --- FFN: w1+relu, then w2 fused with add+LN3 (+ F_t softmax if last) ---
    h = linear(x2.reshape(-1, D), p["w1"], p["b1"], activation="relu",
               out_dtype=jnp.bfloat16)
    out = linear_add_layernorm(h, p["w2"], p["b2"], x2.reshape(-1, D),
                               p["ln3_g"], p["ln3_b"],
                               with_softmax=final_softmax)
    if final_softmax:
        x3, ft = out
        return x3.reshape(B, S, D), ft.reshape(B, S, D)
    return out.reshape(B, S, D), None


def text_decoder_forward(fv, target_embed, params, num_heads):
    """Training-mode branch of TextDecoder.forward.

    fv:           (B, Nv, D)  -- memory
    target_embed: (B, S, D)
    returns: logits (B, S, V), F_t (B, S, D), pred_tokens (B, S)
    """
    B, S, D = target_embed.shape
    pe = params["pos_enc"][:, :S, :]
    x = target_embed + pe
    n_layers = len(params["layers"])
    F_t = None
    for li, lp in enumerate(params["layers"]):
        x, ft = decoder_layer(x, fv, lp, num_heads,
                              final_softmax=(li == n_layers - 1))
        if ft is not None:
            F_t = ft
    dec = x
    V = params["fc_w"].shape[1]
    logits = linear(dec.reshape(-1, D), params["fc_w"], params["fc_b"],
                    out_dtype=jnp.float32).reshape(B, S, V)
    pred_tokens = jnp.argmax(logits, axis=-1)
    return logits, F_t, pred_tokens


def sinusoidal_encoding(max_len, d_model):
    position = jnp.arange(max_len, dtype=jnp.float32)[:, None]
    div_term = jnp.exp(jnp.arange(0, d_model, 2, dtype=jnp.float32)
                       * (-math.log(10000.0) / d_model))
    pe = jnp.zeros((max_len, d_model), dtype=jnp.float32)
    pe = pe.at[:, 0::2].set(jnp.sin(position * div_term))
    pe = pe.at[:, 1::2].set(jnp.cos(position * div_term))
    return pe[None]


def init_params(key, D, FF, V, num_layers, max_len):
    def dense(k, fi, fo):
        return (jax.random.normal(k, (fi, fo), jnp.float32)
                * 0.02).astype(jnp.bfloat16)   # weights stored bf16 for MXU

    zeros = lambda n: jnp.zeros((n,), jnp.float32)
    ones = lambda n: jnp.ones((n,), jnp.float32)
    keys = iter(jax.random.split(key, num_layers * 7 + 1))
    layers = []
    for _ in range(num_layers):
        layers.append({
            "sa_wqkv": dense(next(keys), D, 3 * D), "sa_bqkv": zeros(3 * D),
            "sa_wo": dense(next(keys), D, D), "sa_bo": zeros(D),
            "ca_wq": dense(next(keys), D, D), "ca_bq": zeros(D),
            "ca_wkv": dense(next(keys), D, 2 * D), "ca_bkv": zeros(2 * D),
            "ca_wo": dense(next(keys), D, D), "ca_bo": zeros(D),
            "w1": dense(next(keys), D, FF), "b1": zeros(FF),
            "w2": dense(next(keys), FF, D), "b2": zeros(D),
            "ln1_g": ones(D), "ln1_b": zeros(D),
            "ln2_g": ones(D), "ln2_b": zeros(D),
            "ln3_g": ones(D), "ln3_b": zeros(D),
        })
    return {
        "layers": layers,
        "fc_w": dense(next(keys), D, V),
        "fc_b": zeros(V),
        "pos_enc": sinusoidal_encoding(max_len, D),
    }


if __name__ == "__main__":
    # Small shapes consistent with the module's forward:
    # B=2 batch, Nv=4 visual tokens, S=8 target seq, D=32 hidden, H=4 heads,
    # FF=64 feed-forward, V=64 vocab, L=2 decoder layers.
    B, Nv, S, D, H, FF, V, L = 2, 4, 8, 32, 4, 64, 64, 2

    key = jax.random.PRNGKey(0)
    k_fv, k_tgt, k_par = jax.random.split(key, 3)
    fv = jax.random.normal(k_fv, (B, Nv, D), jnp.float32)
    target_embed = jax.random.normal(k_tgt, (B, S, D), jnp.float32)
    params = init_params(k_par, D, FF, V, L, max_len=S)

    logits, F_t, pred_tokens = text_decoder_forward(fv, target_embed, params, H)
    jax.block_until_ready((logits, F_t, pred_tokens))

    assert logits.shape == (B, S, V)
    assert F_t.shape == (B, S, D)
    assert pred_tokens.shape == (B, S)
    assert bool(jnp.all(jnp.isfinite(logits)))
    assert bool(jnp.all(jnp.isfinite(F_t)))
    print("KERNEL_OK")
</pallas_src>

<mosaic_0001>
module attributes {stable_mosaic.version = 11 : i64} {
  func.func @_linear_kernel(%arg0: i32, %arg1: i32, %arg2: i32, %arg3: memref<16x32xbf16, #tpu.memory_space<vmem>>, %arg4: memref<32x96xbf16, #tpu.memory_space<vmem>>, %arg5: memref<1x96xf32, #tpu.memory_space<vmem>>, %arg6: memref<16x96xbf16, #tpu.memory_space<vmem>>, %arg7: memref<16x96xf32, #tpu.memory_space<vmem>>) attributes {dimension_semantics = [#tpu.dimension_semantics<parallel>, #tpu.dimension_semantics<parallel>, #tpu.dimension_semantics<arbitrary>], iteration_bounds = array<i64: 1, 1, 1>, scalar_prefetch = 0 : i64, scratch_operands = 1 : i64, tpu.core_type = #tpu.core_type<tc>, window_params = [{transform_indices = @transform_0, window_bounds = array<i64: 16, 32>}, {transform_indices = @transform_1, window_bounds = array<i64: 32, 96>}, {transform_indices = @transform_2, window_bounds = array<i64: 1, 96>}, {transform_indices = @transform_3, window_bounds = array<i64: 16, 96>}]} {
    %c0_i32 = arith.constant 0 : i32
    %0 = arith.cmpi eq, %arg2, %c0_i32 : i32
    %1 = arith.extui %0 : i1 to i32
    %c0_i32_0 = arith.constant 0 : i32
    %2 = arith.cmpi ne, %1, %c0_i32_0 : i32
    scf.if %2 {
      %cst_10 = arith.constant 0.000000e+00 : f32
      %12 = vector.broadcast %cst_10 : f32 to vector<16x96xf32>
      %c0_11 = arith.constant 0 : index
      %c0_12 = arith.constant 0 : index
      %13 = vector.load %arg7[%c0_11, %c0_12] : memref<16x96xf32, #tpu.memory_space<vmem>>, vector<16x96xf32>
      tpu.vector_store %arg7[%c0_11, %c0_12], %12 {strides = array<i32>} : memref<16x96xf32, #tpu.memory_space<vmem>>, vector<16x96xf32>,
    } else {
    }
    %c0 = arith.constant 0 : index
    %c0_1 = arith.constant 0 : index
    %3 = vector.load %arg7[%c0, %c0_1] : memref<16x96xf32, #tpu.memory_space<vmem>>, vector<16x96xf32>
    %c0_2 = arith.constant 0 : index
    %c0_3 = arith.constant 0 : index
    %4 = vector.load %arg3[%c0_2, %c0_3] : memref<16x32xbf16, #tpu.memory_space<vmem>>, vector<16x32xbf16>
    %c0_4 = arith.constant 0 : index
    %c0_5 = arith.constant 0 : index
    %5 = vector.load %arg4[%c0_4, %c0_5] : memref<32x96xbf16, #tpu.memory_space<vmem>>, vector<32x96xbf16>
    %cst = arith.constant dense<0.000000e+00> : vector<16x96xf32>
    %6 = tpu.matmul %4, %5, %cst {dimension_numbers = #tpu.dot_dimension_numbers<[1], [0], [0], [1], [0, 0, 1, 1], [], []>} : vector<16x32xbf16>, vector<32x96xbf16>, vector<16x96xf32> -> vector<16x96xf32>
    %7 = arith.addf %3, %6 : vector<16x96xf32>
    %c0_6 = arith.constant 0 : index
    %c0_7 = arith.constant 0 : index
    %8 = vector.load %arg7[%c0_6, %c0_7] : memref<16x96xf32, #tpu.memory_space<vmem>>, vector<16x96xf32>
    tpu.vector_store %arg7[%c0_6, %c0_7], %7 {strides = array<i32>} : memref<16x96xf32, #tpu.memory_space<vmem>>, vector<16x96xf32>,
    %c0_i32_8 = arith.constant 0 : i32
    %9 = arith.cmpi eq, %arg2, %c0_i32_8 : i32
    %10 = arith.extui %9 : i1 to i32
    %c0_i32_9 = arith.constant 0 : i32
    %11 = arith.cmpi ne, %10, %c0_i32_9 : i32
    scf.if %11 {
      %c0_10 = arith.constant 0 : index
      %c0_11 = arith.constant 0 : index
      %12 = vector.load %arg7[%c0_10, %c0_11] : memref<16x96xf32, #tpu.memory_space<vmem>>, vector<16x96xf32>
      %c0_12 = arith.constant 0 : index
      %c0_13 = arith.constant 0 : index
      %13 = vector.load %arg5[%c0_12, %c0_13] : memref<1x96xf32, #tpu.memory_space<vmem>>, vector<1x96xf32>
      %14 = vector.broadcast %13 : vector<1x96xf32> to vector<16x96xf32>
      %15 = arith.addf %12, %14 : vector<16x96xf32>
      %16 = arith.truncf %15 : vector<16x96xf32> to vector<16x96xbf16>
      %c0_14 = arith.constant 0 : index
      %c0_15 = arith.constant 0 : index
      %17 = vector.load %arg6[%c0_14, %c0_15] : memref<16x96xbf16, #tpu.memory_space<vmem>>, vector<16x96xbf16>
      tpu.vector_store %arg6[%c0_14, %c0_15], %16 {strides = array<i32>} : memref<16x96xbf16, #tpu.memory_space<vmem>>, vector<16x96xbf16>,
    } else {
    }
    return
  }
  func.func @transform_0(%arg0: i32, %arg1: i32, %arg2: i32) -> (i32, i32) {
    %c0_i32 = arith.constant 0 : i32
    return %arg0, %arg2 : i32, i32
  }
  func.func @transform_1(%arg0: i32, %arg1: i32, %arg2: i32) -> (i32, i32) {
    %c0_i32 = arith.constant 0 : i32
    return %arg2, %arg1 : i32, i32
  }
  func.func @transform_2(%arg0: i32, %arg1: i32, %arg2: i32) -> (i32, i32) {
    %c0_i32 = arith.constant 0 : i32
    %c0_i32_0 = arith.constant 0 : i32
    return %c0_i32, %arg1 : i32, i32
  }
  func.func @transform_3(%arg0: i32, %arg1: i32, %arg2: i32) -> (i32, i32) {
    %c0_i32 = arith.constant 0 : i32
    return %arg0, %arg1 : i32, i32
  }
}

</mosaic_0001>

<llo_original>
// kernel: tpu_custom_call.1
$region0: #{tpu_custom_call.1}
  #allocation0 [shape = 'u32[]', space=smem, size = 0x4, offset = 0x4, fixed_abs, tag = 'smem constant byte address 0x4 - core index']
  #allocation1 [shape = 'u32[144,128]{1,0:T(1,128)}', space=vmem, size = 0x12000, scoped, tag = 'internal scratch']
  #allocation2 [shape = 'f32[16,96]{1,0:T(8,128)}', space=vmem, size = 0x2000, scoped, tag = 'scratch operand']
  %s0 = inlined_call_operand.hbm [shape: bf16[16,32], index: 0, kind: input, shape index: {}]
  %s1 = inlined_call_operand.hbm [shape: bf16[32,96], index: 1, kind: input, shape index: {}]
  %s2 = inlined_call_operand.vmem [shape: f32[1,96], index: 2, kind: input, shape index: {}]
  %s3 = inlined_call_operand.hbm [shape: bf16[16,96], index: 3, kind: output, shape index: {}]
  %s4 = sld [smem:[#allocation0]]
  $region38: #{tpu_custom_call.1} parent=0
    _
  %s6 = ssub.s32 1, %s4
  %s7 = scalar_select 0, %s6, %s4
  $region1: #{tpu_custom_call.1} parent=0
    #allocation3 [shape = 'u8[4096]{0}', space=vmem, size = 0x1000, scoped, tag = 'input window, operand 0, single buffered']
    #allocation4 [shape = 's32[1]{0}', space=sflag, size = 0x4, scoped, tag = 'scoped memory for tpu_custom_call.1']
    #allocation5 [shape = 's32[1]{0}', space=sflag, size = 0x4, scoped, tag = 'scoped memory for tpu_custom_call.1']
    #allocation6 [shape = 'u8[8192]{0}', space=vmem, size = 0x2000, scoped, tag = 'input window, operand 1, single buffered']
    #allocation7 [shape = 's32[1]{0}', space=sflag, size = 0x4, scoped, tag = 'scoped memory for tpu_custom_call.1']
    #allocation8 [shape = 'u8[4096]{0}', space=vmem, size = 0x1000, scoped, tag = 'output window, operand 0, single buffered']
    %8 = vsyncpa [#allocation4], 0
    %9 = vsyncpa [#allocation7], 0
    %10 = vsyncpa [#allocation5], 0
    // Predicated region
    $region2: #{tpu_custom_call.1} parent=1 // pred_check
      _
    $region3: #{tpu_custom_call.1} parent=1 // pred_check_branch
      %12 = sbr.rel (0) target = $region5
    $region4: #{tpu_custom_call.1} parent=1 // pred_region
      %s14 = ssub.s32 128, 128
      %15 = vsyncadd [#allocation4], %s14
      %s16 = sshll.u32 [#allocation3], 4
      %s17 = int_to_ptr.vmem [resolvable:$true] %s16
      %22 = dma.hbm_to_vmem [thread:$0]  %s0, 128, %s17, [#allocation4], 64, 64, 4
    $region5: #{tpu_custom_call.1} parent=1 // pred_fallthru
      _
    // Predicated region
    $region6: #{tpu_custom_call.1} parent=1 // pred_check
      _
    $region7: #{tpu_custom_call.1} parent=1 // pred_check_branch
      %24 = sbr.rel (0) target = $region9
    $region8: #{tpu_custom_call.1} parent=1 // pred_region
      %s26 = ssub.s32 256, 256
      %27 = vsyncadd [#allocation7], %s26
      %s28 = sshll.u32 [#allocation6], 4
      %s29 = int_to_ptr.vmem [resolvable:$true] %s28
      %34 = dma.hbm_to_vmem [thread:$0]  %s1, 256, %s29, [#allocation7], 64, 64, 4
    $region9: #{tpu_custom_call.1} parent=1 // pred_fallthru
      _
    // Predicated region
    $region10: #{tpu_custom_call.1} parent=1 // pred_check
      _
    $region11: #{tpu_custom_call.1} parent=1 // pred_check_branch
      %36 = sbr.rel (0) target = $region13
    $region12: #{tpu_custom_call.1} parent=1 // pred_region
      _
    $region13: #{tpu_custom_call.1} parent=1 // pred_fallthru
      _
    // Predicated region
    $region14: #{tpu_custom_call.1} parent=1 // pred_check
      _
    $region15: #{tpu_custom_call.1} parent=1 // pred_check_branch
      %38 = sbr.rel (0) target = $region17
    $region16: #{tpu_custom_call.1} parent=1 // pred_region
      %39 = dma.done [#allocation4], 128
    $region17: #{tpu_custom_call.1} parent=1 // pred_fallthru
      _
    // Predicated region
    $region18: #{tpu_custom_call.1} parent=1 // pred_check
      _
    $region19: #{tpu_custom_call.1} parent=1 // pred_check_branch
      %41 = sbr.rel (0) target = $region21
    $region20: #{tpu_custom_call.1} parent=1 // pred_region
      %42 = dma.done [#allocation7], 256
    $region21: #{tpu_custom_call.1} parent=1 // pred_fallthru
      _
    %p44 = scmp.eq.s32.totalorder 0, 0
    // Predicated region
    $region22: #{tpu_custom_call.1} parent=1 // pred_check
      %p45 = pneg %p44
    $region23: #{tpu_custom_call.1} parent=1 // pred_check_branch
      %47 = sbr.rel (%p45) target = $region25
    $region24: #{tpu_custom_call.1} parent=1 // pred_region
      %vm48 = vcmask 785408
      %49 = vst.msk [vmem:[#allocation2] sm:$0xff] %vm48, 0.0
      %50 = vst.msk [vmem:[#allocation2 + $0x8] sm:$0xff] %vm48, 0.0
    $region25: #{tpu_custom_call.1} parent=1 // pred_fallthru
      _
    %v51 = vld [vmem:[#allocation2] sm:$0xff]
    %v52 = vld [vmem:[#allocation2 + $0x8] sm:$0xff]
    %v53 = vld [vmem:[#allocation3] sm:$0xf]
    %v54 = vld [vmem:[#allocation3 + $0x4] sm:$0xf]
    %v55 = vld [vmem:[#allocation6] sm:$0xf]
    %v56 = vld [vmem:[#allocation6 + $0x4] sm:$0xf]
    %v57 = vld [vmem:[#allocation6 + $0x8] sm:$0xf]
    %v58 = vld [vmem:[#allocation6 + $0xc] sm:$0xf]
    %v61 = vunpack.c.l.b16 %v53
    %v62 = vunpack.c.l.b16 %v54
    %v63 = vpack.c.b16 %v62, %v61
    %v68 = vunpack.c.l.b16 %v55
    %v69 = vunpack.c.l.b16 %v56
    %v70 = vunpack.c.l.b16 %v57
    %v71 = vunpack.c.l.b16 %v58
    %v72 = vpack.c.b16 %v69, %v68
    %v73 = vpack.c.b16 %v71, %v70
    %vm76 = vcmask 261120
    %v78 = vsel %vm76, %v63, 0
    %80 = vmatprep.subr.bf16.mxu0 0
    %81 = vmatpush1.bf16.msra.mxu0 %v72
    %82 = vmatprep.subr.bf16.mxu0 0
    %83 = vmatpush1.bf16.msra.mxu0 %v73
    %84 = vmatprep.subr.bf16.mxu0 0
    %85 = vmatpush1.bf16.msra.mxu0 0
    %86 = vmatprep.subr.bf16.mxu0 0
    %87 = vmatpush1.bf16.msra.mxu0 0
    %88 = vmatprep.subr.bf16.mxu0 0
    %89 = vmatpush1.bf16.msra.mxu0 0
    %90 = vmatprep.subr.bf16.mxu0 0
    %91 = vmatpush1.bf16.msra.mxu0 0
    %92 = vmatprep.subr.bf16.mxu0 0
    %93 = vmatpush1.bf16.msra.mxu0 0
    %94 = vmatprep.subr.bf16.mxu0 0
    %95 = vmatpush1.bf16.msra.mxu0 0
    %96 = vmatprep.subr.bf16.mxu0 0
    %97 = vmatpush1.bf16.msra.mxu0 0
    %98 = vmatprep.subr.bf16.mxu0 0
    %99 = vmatpush1.bf16.msra.mxu0 0
    %100 = vmatprep.subr.bf16.mxu0 0
    %101 = vmatpush1.bf16.msra.mxu0 0
    %102 = vmatprep.subr.bf16.mxu0 0
    %103 = vmatpush1.bf16.msra.mxu0 0
    %104 = vmatprep.subr.bf16.mxu0 0
    %105 = vmatpush1.bf16.msra.mxu0 0
    %106 = vmatprep.subr.bf16.mxu0 0
    %107 = vmatpush1.bf16.msra.mxu0 0
    %108 = vmatprep.subr.bf16.mxu0 0
    %109 = vmatpush1.bf16.msra.mxu0 0
    %110 = vmatprep.subr.bf16.mxu0 0
    %111 = vmatpush1.bf16.msra.mxu0 0
    %112 = vmatprep.mubr.bf16.mxu0 0
    %113 = vmatmul.mubr.bf16.gmra.mrb[0].mxu0 %v78
    %v114 = vpop.f32.mrb[0].mxu0
    %v115 = vadd.f32 0.0, %v114
    %v116 = vpop.f32.mrb[0].mxu0
    %v117 = vpop.f32.mrb[0].mxu0
    %v118 = vadd.f32 0.0, %v117
    %v119 = vpop.f32.mrb[0].mxu0
    %120 = vdwg.mxu0
    %v121 = vadd.f32 %v51, %v115
    %v122 = vadd.f32 %v52, %v118
    %vm123 = vcmask 785408
    %124 = vst.msk [vmem:[#allocation2] sm:$0xff] %vm123, %v121
    %125 = vst.msk [vmem:[#allocation2 + $0x8] sm:$0xff] %vm123, %v122
    // Predicated region
    $region26: #{tpu_custom_call.1} parent=1 // pred_check
      %p126 = pneg %p44
    $region27: #{tpu_custom_call.1} parent=1 // pred_check_branch
      %128 = sbr.rel (%p126) target = $region29
    $region28: #{tpu_custom_call.1} parent=1 // pred_region
      %v129 = vld [vmem:[#allocation2] sm:$0xff]
      %v130 = vld [vmem:[#allocation2 + $0x8] sm:$0xff]
      %v131 = vld [vmem:[%s2] sm:$0x1]
      %v133 = vlaneseq
      %v134 = vshrl.u32 %v133, 7
      %v135 = vsub.s32 0, %v134
      %v136 = vrot.slane %v131, %v135
      %v138 = vadd.f32 %v129, %v136
      %v139 = vadd.f32 %v130, %v136
      %v140 = vpack.c.bf16 %v139, %v138
      %v142 = vunpack.c.l.b16 %v140
      %v143 = vunpack.c.h.b16 %v140
      %v144 = vpack.c.b16 %v142, %v142
      %v145 = vpack.c.b16 %v143, %v143
      %vm148 = vcmask 781312
      %149 = vst.msk [vmem:[#allocation8] sm:$0xf] %vm148, %v144
      %150 = vst.msk [vmem:[#allocation8 + $0x4] sm:$0xf] %vm148, %v145
    $region29: #{tpu_custom_call.1} parent=1 // pred_fallthru
      _
    // Predicated region
    $region30: #{tpu_custom_call.1} parent=1 // pred_check
      _
    $region31: #{tpu_custom_call.1} parent=1 // pred_check_branch
      %152 = sbr.rel (0) target = $region33
    $region32: #{tpu_custom_call.1} parent=1 // pred_region
      %s154 = ssub.s32 128, 128
      %155 = vsyncadd [#allocation5], %s154
      %s156 = sshll.u32 [#allocation8], 4
      %s157 = int_to_ptr.vmem [resolvable:$true] %s156
      %162 = dma.vmem_to_hbm [thread:$0]  %s157, 128, %s3, [#allocation5], 64, 64, 4
    $region33: #{tpu_custom_call.1} parent=1 // pred_fallthru
      _
    // Predicated region
    $region34: #{tpu_custom_call.1} parent=1 // pred_check
      _
    $region35: #{tpu_custom_call.1} parent=1 // pred_check_branch
      %164 = sbr.rel (0) target = $region37
    $region36: #{tpu_custom_call.1} parent=1 // pred_region
      %165 = dma.done [#allocation5], 128
    $region37: #{tpu_custom_call.1} parent=1 // pred_fallthru
      _
    %166 = vsyncpa [#allocation4], 1
    %167 = vsyncpa [#allocation7], 1
    %168 = vsyncpa [#allocation5], 1

</llo_original>
